<compile_context>
chip_gen: v5e
topology: v5e:2x2
jax: 0.10.0
libtpu: 0.0.40
codegen_flags: <defaults>
</compile_context>

<pallas_src>
import math
import functools

import jax
import jax.numpy as jnp
from jax import lax
from jax.experimental import pallas as pl
from jax.experimental.pallas import tpu as pltpu


_SQRT_HALF = 1.0 / math.sqrt(2.0)
_LN_EPS = 1e-5


# ----------------------------- in-kernel math helpers -----------------------------

def _erf(x):
    # Abramowitz & Stegun 7.1.26 erf (max abs err ~1.5e-7 in f32 == f32 noise).
    # PyTorch nn.GELU() default is the exact erf GELU; this uses only mul/add/exp/
    # reciprocal/select which lower cleanly on every TPU generation.
    a1, a2, a3, a4, a5 = 0.254829592, -0.284496736, 1.421413741, -1.453152027, 1.061405429
    p = 0.3275911
    ax = jnp.abs(x)
    denom = 1.0 + p * ax
    # Divide -> EUP approximate reciprocal (co-issues with the VALU; ~free).
    t = pl.reciprocal(denom.astype(jnp.float32), approx=True).astype(x.dtype)
    poly = ((((a5 * t + a4) * t + a3) * t + a2) * t + a1) * t
    y = 1.0 - poly * jnp.exp(-ax * ax)
    return jnp.where(x >= 0.0, y, -y)


def _gelu_exact(x):
    return 0.5 * x * (1.0 + _erf(x * _SQRT_HALF))


# ----------------------------- fused Pallas kernel -----------------------------

def patch_embed_ln_gelu_kernel(p_ref, w_ref, b_ref, g_ref, beta_ref, o_ref, *, bf16_gelu):
    """One (batch, spatial-tile) grid step.

    p_ref   : (K, TN)   bf16  patch columns, K = Cin*p^3, lanes = spatial positions
    w_ref   : (Cout, K) bf16  flattened Conv3d weight (PyTorch (Cout,Cin,kd,kh,kw) order)
    b_ref   : (Cout, 1) f32   conv bias
    g_ref   : (Cout, 1) f32   LayerNormChannel weight
    beta_ref: (Cout, 1) f32   LayerNormChannel bias
    o_ref   : (Cout, TN) bf16 output tile (channel-major == NCDHW flattened)
    """
    # Conv3d(kernel=stride=patch) as a single lane-dense matmul, f32 accumulation.
    y = jnp.dot(w_ref[...], p_ref[...], preferred_element_type=jnp.float32)
    y = y + b_ref[...]

    # LayerNormChannel: stats over the channel (sublane) axis, per spatial location,
    # always in f32 (safe on v5e, keeps parity with the PyTorch reference).
    u = jnp.mean(y, axis=0, keepdims=True)
    d = y - u
    s = jnp.mean(d * d, axis=0, keepdims=True)
    yh = d * lax.rsqrt(s + _LN_EPS)            # rsqrt -> EUP slot
    z = g_ref[...] * yh + beta_ref[...]

    if bf16_gelu:
        # v6e/v7x: bf16 VALU/EUP -> ~halves the erf-polynomial op cost.  Values are
        # LayerNorm-normalized so bf16 range/precision is safe.
        z = z.astype(jnp.bfloat16)
    o_ref[...] = _gelu_exact(z).astype(o_ref.dtype)


# ----------------------------- tile selection -----------------------------

def _round_up(x, m):
    return ((x + m - 1) // m) * m


def _tpu_generation():
    try:
        kind = jax.devices()[0].device_kind.lower()
    except Exception:
        kind = ""
    if "v7" in kind:
        return 7
    if "v6" in kind:
        return 6
    if "v5" in kind:
        return 5
    return 0  # unknown -> conservative defaults


def _select_tile(n, k, cout, budget_bytes, batch):
    """Pick (tn, n_padded): tn a multiple of 128 whose double-buffered VMEM footprint
    fits `budget_bytes`, preferring the 1024+ sweet spot; pad awkward N instead of
    degrading to tiny tiles or VMEM-blowing full-N blocks."""
    per_col = 2 * (2 * k + 2 * cout)                 # bf16 patch col + bf16 out col, x2 buffers
    fixed = 2 * (2 * cout * k) + 2 * 3 * (4 * cout)  # bf16 weight + 3 f32 param vectors, x2 buffers
    avail = max(budget_bytes - fixed, 128 * per_col)
    tn_cap = max(128, (avail // per_col) // 128 * 128)
    tn_cap = min(tn_cap, 1 << 15)                    # sanity cap

    n128 = _round_up(n, 128)
    if n128 <= tn_cap:
        tn, n_pad = n128, n128
    else:
        # largest 128-multiple divisor of n128 that fits the cap
        best, t = 128, 128
        while t <= tn_cap:
            if n128 % t == 0:
                best = t
            t += 128
        if best >= min(1024, tn_cap):
            tn, n_pad = best, n128
        else:
            tn = min(tn_cap, 4096)
            n_pad = _round_up(n128, tn)

    # v7x load balance: make sure there are >= 2 grid steps so both TCs get work.
    while batch * (n_pad // tn) < 2 and tn > 128 and tn % 256 == 0:
        tn //= 2
    return tn, n_pad


# ----------------------------- wrapper -----------------------------

def conv_forward(x, w, b, gamma, beta, patch_size, out_dtype=jnp.bfloat16):
    """Forward of `Conv`: Conv3d(k=p, s=p) + LayerNormChannel + exact GELU.

    x     : [B, Cin, D, H, W]      (PyTorch NCDHW)
    w     : [Cout, Cin, p, p, p]   (PyTorch Conv3d weight layout)
    b     : [Cout]
    gamma : [Cout]   (LayerNormChannel weight)
    beta  : [Cout]   (LayerNormChannel bias)
    returns [B, Cout, D//p, H//p, W//p] in `out_dtype` (bf16 by default: the output is
    the dominant HBM stream of this mem-bound kernel).
    """
    p = patch_size
    B, Cin, D, H, W = x.shape
    Cout = w.shape[0]
    Do, Ho, Wo = D // p, H // p, W // p
    N = Do * Ho * Wo
    K = Cin * p * p * p

    gen = _tpu_generation()
    if gen == 7:
        vmem_budget, vmem_limit = 24 << 20, 48 << 20     # 64 MiB physical per TC
    else:
        vmem_budget, vmem_limit = 48 << 20, 96 << 20     # 128 MiB physical (v5e/v6e)
    bf16_gelu = gen >= 6                                  # v5e/unknown: keep f32 VPU/EUP

    tn, n_pad = _select_tile(N, K, Cout, vmem_budget, B)

    # Non-overlapping patch extraction (pure rearrangement, same byte count as x):
    #   [B,Cin,D,H,W] -> [B, K=(cin,pd,ph,pw), N=(do,ho,wo)]
    # K ordering matches the PyTorch weight flatten below.
    xr = x.reshape(B, Cin, Do, p, Ho, p, Wo, p)
    xr = jnp.transpose(xr, (0, 1, 3, 5, 7, 2, 4, 6))
    patches = xr.reshape(B, K, N)
    if n_pad > N:
        patches = jnp.pad(patches, ((0, 0), (0, 0), (0, n_pad - N)))
    patches = patches.astype(jnp.bfloat16)                # bf16 MXU operands
    w2 = w.reshape(Cout, K).astype(jnp.bfloat16)
    b2 = b.reshape(Cout, 1).astype(jnp.float32)
    g2 = gamma.reshape(Cout, 1).astype(jnp.float32)
    beta2 = beta.reshape(Cout, 1).astype(jnp.float32)

    grid = (B, n_pad // tn)

    cost = pl.CostEstimate(
        flops=2 * B * Cout * K * n_pad,
        transcendentals=B * Cout * n_pad,                 # one exp per output element
        bytes_accessed=(B * K * n_pad * 2                 # patches (bf16)
                        + Cout * K * 2                    # weights (bf16)
                        + B * Cout * n_pad * 2            # output (bf16)
                        + 3 * Cout * 4),
    )

    kernel = functools.partial(patch_embed_ln_gelu_kernel, bf16_gelu=bf16_gelu)

    out = pl.pallas_call(
        kernel,
        out_shape=jax.ShapeDtypeStruct((B, Cout, n_pad), jnp.bfloat16),
        grid=grid,
        in_specs=[
            pl.BlockSpec((None, K, tn), lambda bb, nn: (bb, 0, nn)),
            pl.BlockSpec((Cout, K), lambda bb, nn: (0, 0)),
            pl.BlockSpec((Cout, 1), lambda bb, nn: (0, 0)),
            pl.BlockSpec((Cout, 1), lambda bb, nn: (0, 0)),
            pl.BlockSpec((Cout, 1), lambda bb, nn: (0, 0)),
        ],
        out_specs=pl.BlockSpec((None, Cout, tn), lambda bb, nn: (bb, 0, nn)),
        compiler_params=pltpu.CompilerParams(
            dimension_semantics=("parallel", "parallel"),
            vmem_limit_bytes=vmem_limit,
        ),
        cost_estimate=cost,
    )(patches, w2, b2, g2, beta2)

    # Output is already channel-major: drop spatial padding, reshape back to NCDHW.
    out = out[:, :, :N].reshape(B, Cout, Do, Ho, Wo)
    return out.astype(out_dtype)


# ----------------------------- main -----------------------------

if __name__ == "__main__":
    key = jax.random.PRNGKey(0)
    B, Cin, S = 2, 4, 16          # batch=2, in_channels=4, img_size=16
    patch_size = 2
    Cout = 32                     # hidden_size

    k1, k2, k3 = jax.random.split(key, 3)
    x = jax.random.normal(k1, (B, Cin, S, S, S), dtype=jnp.float32)

    # PyTorch-style Conv3d init (uniform in +/- 1/sqrt(fan_in)), PyTorch weight layout.
    fan_in = Cin * patch_size ** 3
    bound = 1.0 / math.sqrt(fan_in)
    w = jax.random.uniform(k2, (Cout, Cin, patch_size, patch_size, patch_size),
                           minval=-bound, maxval=bound, dtype=jnp.float32)
    b = jax.random.uniform(k3, (Cout,), minval=-bound, maxval=bound, dtype=jnp.float32)
    gamma = jnp.ones((Cout,), jnp.float32)    # LayerNormChannel weight init
    beta = jnp.zeros((Cout,), jnp.float32)    # LayerNormChannel bias init

    fwd = jax.jit(functools.partial(conv_forward, patch_size=patch_size))
    out = fwd(x, w, b, gamma, beta)
    jax.block_until_ready(out)
    assert out.shape == (B, Cout, S // patch_size, S // patch_size, S // patch_size)

    # Sanity check against a pure-XLA f32 reference (bf16 MXU operands + bf16 output
    # and GELU in the kernel -> generous tolerance).
    ref = lax.conv_general_dilated(
        x, w, window_strides=(patch_size,) * 3, padding="VALID",
        dimension_numbers=("NCDHW", "OIDHW", "NCDHW"))
    ref = ref + b.reshape(1, Cout, 1, 1, 1)
    u = ref.mean(axis=1, keepdims=True)
    s = ((ref - u) ** 2).mean(axis=1, keepdims=True)
    refn = (ref - u) / jnp.sqrt(s + _LN_EPS)
    refn = gamma.reshape(1, Cout, 1, 1, 1) * refn + beta.reshape(1, Cout, 1, 1, 1)
    ref_out = jax.nn.gelu(refn, approximate=False)
    err = float(jnp.max(jnp.abs(out.astype(jnp.float32) - ref_out)))
    if err > 0.1:
        raise AssertionError(f"kernel/reference mismatch: max abs err = {err}")

    print("KERNEL_OK")
</pallas_src>

<mosaic_0001>
module attributes {stable_mosaic.version = 11 : i64} {
  func.func @patch_embed_ln_gelu_kernel(%arg0: i32, %arg1: i32, %arg2: memref<1x32x512xbf16, #tpu.memory_space<vmem>>, %arg3: memref<32x32xbf16, #tpu.memory_space<vmem>>, %arg4: memref<32x1xf32, #tpu.memory_space<vmem>>, %arg5: memref<32x1xf32, #tpu.memory_space<vmem>>, %arg6: memref<32x1xf32, #tpu.memory_space<vmem>>, %arg7: memref<1x32x512xbf16, #tpu.memory_space<vmem>>) attributes {dimension_semantics = [#tpu.dimension_semantics<parallel>, #tpu.dimension_semantics<parallel>], iteration_bounds = array<i64: 2, 1>, scalar_prefetch = 0 : i64, scratch_operands = 0 : i64, tpu.core_type = #tpu.core_type<tc>, window_params = [{transform_indices = @transform_0, window_bounds = array<i64: 1, 32, 512>}, {pipeline_mode = #tpu.pipeline_mode<synchronous>, transform_indices = @transform_1, window_bounds = array<i64: 32, 32>}, {pipeline_mode = #tpu.pipeline_mode<synchronous>, transform_indices = @transform_2, window_bounds = array<i64: 32, 1>}, {pipeline_mode = #tpu.pipeline_mode<synchronous>, transform_indices = @transform_3, window_bounds = array<i64: 32, 1>}, {pipeline_mode = #tpu.pipeline_mode<synchronous>, transform_indices = @transform_4, window_bounds = array<i64: 32, 1>}, {transform_indices = @transform_5, window_bounds = array<i64: 1, 32, 512>}]} {
    %c0 = arith.constant 0 : index
    %c0_0 = arith.constant 0 : index
    %0 = vector.load %arg3[%c0, %c0_0] : memref<32x32xbf16, #tpu.memory_space<vmem>>, vector<32x32xbf16>
    %c0_1 = arith.constant 0 : index
    %c0_2 = arith.constant 0 : index
    %c0_3 = arith.constant 0 : index
    %1 = vector.load %arg2[%c0_1, %c0_2, %c0_3] : memref<1x32x512xbf16, #tpu.memory_space<vmem>>, vector<1x32x512xbf16>
    %2 = vector.shape_cast %1 : vector<1x32x512xbf16> to vector<32x512xbf16>
    %cst = arith.constant dense<0.000000e+00> : vector<32x512xf32>
    %3 = tpu.matmul %0, %2, %cst {dimension_numbers = #tpu.dot_dimension_numbers<[1], [0], [0], [1], [0, 0, 1, 1], [], []>} : vector<32x32xbf16>, vector<32x512xbf16>, vector<32x512xf32> -> vector<32x512xf32>
    %c0_4 = arith.constant 0 : index
    %c0_5 = arith.constant 0 : index
    %4 = vector.load %arg4[%c0_4, %c0_5] : memref<32x1xf32, #tpu.memory_space<vmem>>, vector<32x1xf32>
    %5 = vector.broadcast %4 : vector<32x1xf32> to vector<32x512xf32>
    %6 = arith.addf %3, %5 : vector<32x512xf32>
    %cst_6 = arith.constant dense<0.000000e+00> : vector<512xf32>
    %7 = vector.multi_reduction <add>, %6, %cst_6 [0] : vector<32x512xf32> to vector<512xf32>
    %8 = vector.shape_cast %7 : vector<512xf32> to vector<1x512xf32>
    %cst_7 = arith.constant 3.200000e+01 : f32
    %9 = vector.broadcast %cst_7 : f32 to vector<1x512xf32>
    %10 = arith.divf %8, %9 : vector<1x512xf32>
    %11 = vector.broadcast %10 : vector<1x512xf32> to vector<32x512xf32>
    %12 = arith.subf %6, %11 : vector<32x512xf32>
    %13 = arith.mulf %12, %12 : vector<32x512xf32>
    %cst_8 = arith.constant dense<0.000000e+00> : vector<512xf32>
    %14 = vector.multi_reduction <add>, %13, %cst_8 [0] : vector<32x512xf32> to vector<512xf32>
    %15 = vector.shape_cast %14 : vector<512xf32> to vector<1x512xf32>
    %cst_9 = arith.constant 3.200000e+01 : f32
    %16 = vector.broadcast %cst_9 : f32 to vector<1x512xf32>
    %17 = arith.divf %15, %16 : vector<1x512xf32>
    %cst_10 = arith.constant 9.99999974E-6 : f32
    %18 = vector.broadcast %cst_10 : f32 to vector<1x512xf32>
    %19 = arith.addf %17, %18 : vector<1x512xf32>
    %20 = math.rsqrt %19 : vector<1x512xf32>
    %21 = vector.broadcast %20 : vector<1x512xf32> to vector<32x512xf32>
    %22 = arith.mulf %12, %21 : vector<32x512xf32>
    %c0_11 = arith.constant 0 : index
    %c0_12 = arith.constant 0 : index
    %23 = vector.load %arg5[%c0_11, %c0_12] : memref<32x1xf32, #tpu.memory_space<vmem>>, vector<32x1xf32>
    %24 = vector.broadcast %23 : vector<32x1xf32> to vector<32x512xf32>
    %25 = arith.mulf %24, %22 : vector<32x512xf32>
    %c0_13 = arith.constant 0 : index
    %c0_14 = arith.constant 0 : index
    %26 = vector.load %arg6[%c0_13, %c0_14] : memref<32x1xf32, #tpu.memory_space<vmem>>, vector<32x1xf32>
    %27 = vector.broadcast %26 : vector<32x1xf32> to vector<32x512xf32>
    %28 = arith.addf %25, %27 : vector<32x512xf32>
    %cst_15 = arith.constant 5.000000e-01 : f32
    %29 = vector.broadcast %cst_15 : f32 to vector<32x512xf32>
    %30 = arith.mulf %29, %28 : vector<32x512xf32>
    %cst_16 = arith.constant 0.707106769 : f32
    %31 = vector.broadcast %cst_16 : f32 to vector<32x512xf32>
    %32 = arith.mulf %28, %31 : vector<32x512xf32>
    %33 = math.absf %32 : vector<32x512xf32>
    %cst_17 = arith.constant 0.327591091 : f32
    %34 = vector.broadcast %cst_17 : f32 to vector<32x512xf32>
    %35 = arith.mulf %34, %33 : vector<32x512xf32>
    %cst_18 = arith.constant 1.000000e+00 : f32
    %36 = vector.broadcast %cst_18 : f32 to vector<32x512xf32>
    %37 = arith.addf %36, %35 : vector<32x512xf32>
    %38 = tpu.reciprocal %37 {approx = true} : vector<32x512xf32> -> vector<32x512xf32>
    %cst_19 = arith.constant 1.06140542 : f32
    %39 = vector.broadcast %cst_19 : f32 to vector<32x512xf32>
    %40 = arith.mulf %39, %38 : vector<32x512xf32>
    %cst_20 = arith.constant -1.45315206 : f32
    %41 = vector.broadcast %cst_20 : f32 to vector<32x512xf32>
    %42 = arith.addf %40, %41 : vector<32x512xf32>
    %43 = arith.mulf %42, %38 : vector<32x512xf32>
    %cst_21 = arith.constant 1.42141378 : f32
    %44 = vector.broadcast %cst_21 : f32 to vector<32x512xf32>
    %45 = arith.addf %43, %44 : vector<32x512xf32>
    %46 = arith.mulf %45, %38 : vector<32x512xf32>
    %cst_22 = arith.constant -0.284496725 : f32
    %47 = vector.broadcast %cst_22 : f32 to vector<32x512xf32>
    %48 = arith.addf %46, %47 : vector<32x512xf32>
    %49 = arith.mulf %48, %38 : vector<32x512xf32>
    %cst_23 = arith.constant 0.254829586 : f32
    %50 = vector.broadcast %cst_23 : f32 to vector<32x512xf32>
    %51 = arith.addf %49, %50 : vector<32x512xf32>
    %52 = arith.mulf %51, %38 : vector<32x512xf32>
    %cst_24 = arith.constant 0.000000e+00 : f32
    %53 = vector.broadcast %cst_24 : f32 to vector<32x512xf32>
    %54 = arith.subf %53, %33 : vector<32x512xf32>
    %55 = arith.mulf %54, %33 : vector<32x512xf32>
    %56 = math.exp %55 : vector<32x512xf32>
    %57 = arith.mulf %52, %56 : vector<32x512xf32>
    %cst_25 = arith.constant 1.000000e+00 : f32
    %58 = vector.broadcast %cst_25 : f32 to vector<32x512xf32>
    %59 = arith.subf %58, %57 : vector<32x512xf32>
    %cst_26 = arith.constant 0.000000e+00 : f32
    %60 = vector.broadcast %cst_26 : f32 to vector<32x512xf32>
    %61 = arith.cmpf oge, %32, %60 : vector<32x512xf32>
    %cst_27 = arith.constant 0.000000e+00 : f32
    %62 = vector.broadcast %cst_27 : f32 to vector<32x512xf32>
    %63 = arith.subf %62, %59 : vector<32x512xf32>
    %64 = arith.select %61, %59, %63 : vector<32x512xi1>, vector<32x512xf32>
    %cst_28 = arith.constant 1.000000e+00 : f32
    %65 = vector.broadcast %cst_28 : f32 to vector<32x512xf32>
    %66 = arith.addf %65, %64 : vector<32x512xf32>
    %67 = arith.mulf %30, %66 : vector<32x512xf32>
    %68 = arith.truncf %67 : vector<32x512xf32> to vector<32x512xbf16>
    %c0_29 = arith.constant 0 : index
    %c0_30 = arith.constant 0 : index
    %c0_31 = arith.constant 0 : index
    %69 = vector.load %arg7[%c0_29, %c0_30, %c0_31] : memref<1x32x512xbf16, #tpu.memory_space<vmem>>, vector<1x32x512xbf16>
    %70 = vector.shape_cast %69 : vector<1x32x512xbf16> to vector<32x512xbf16>
    %71 = vector.shape_cast %68 : vector<32x512xbf16> to vector<1x32x512xbf16>
    tpu.vector_store %arg7[%c0_29, %c0_30, %c0_31], %71 {strides = array<i32>} : memref<1x32x512xbf16, #tpu.memory_space<vmem>>, vector<1x32x512xbf16>,
    return
  }
  func.func @transform_0(%arg0: i32, %arg1: i32) -> (i32, i32, i32) {
    %c0_i32 = arith.constant 0 : i32
    %c0_i32_0 = arith.constant 0 : i32
    return %arg0, %c0_i32, %arg1 : i32, i32, i32
  }
  func.func @transform_1(%arg0: i32, %arg1: i32) -> (i32, i32) {
    %c0_i32 = arith.constant 0 : i32
    %c0_i32_0 = arith.constant 0 : i32
    %c0_i32_1 = arith.constant 0 : i32
    return %c0_i32, %c0_i32_0 : i32, i32
  }
  func.func @transform_2(%arg0: i32, %arg1: i32) -> (i32, i32) {
    %c0_i32 = arith.constant 0 : i32
    %c0_i32_0 = arith.constant 0 : i32
    %c0_i32_1 = arith.constant 0 : i32
    return %c0_i32, %c0_i32_0 : i32, i32
  }
  func.func @transform_3(%arg0: i32, %arg1: i32) -> (i32, i32) {
    %c0_i32 = arith.constant 0 : i32
    %c0_i32_0 = arith.constant 0 : i32
    %c0_i32_1 = arith.constant 0 : i32
    return %c0_i32, %c0_i32_0 : i32, i32
  }
  func.func @transform_4(%arg0: i32, %arg1: i32) -> (i32, i32) {
    %c0_i32 = arith.constant 0 : i32
    %c0_i32_0 = arith.constant 0 : i32
    %c0_i32_1 = arith.constant 0 : i32
    return %c0_i32, %c0_i32_0 : i32, i32
  }
  func.func @transform_5(%arg0: i32, %arg1: i32) -> (i32, i32, i32) {
    %c0_i32 = arith.constant 0 : i32
    %c0_i32_0 = arith.constant 0 : i32
    return %arg0, %c0_i32, %arg1 : i32, i32, i32
  }
}

</mosaic_0001>

<llo_original>
// kernel: conv_forward.1
$region0: #{conv_forward.1}
  #allocation0 [shape = 'u32[]', space=smem, size = 0x4, offset = 0x4, fixed_abs, tag = 'smem constant byte address 0x4 - core index']
  #allocation1 [shape = 'u32[72,128]{1,0:T(1,128)}', space=vmem, size = 0x9000, scoped, tag = 'internal scratch']
  %s0 = inlined_call_operand.vmem [shape: bf16[2,32,512], index: 0, kind: input, shape index: {}]
  %s1 = inlined_call_operand.vmem [shape: bf16[32,32], index: 1, kind: input, shape index: {}]
  %s2 = inlined_call_operand.vmem [shape: f32[32,1], index: 2, kind: input, shape index: {}]
  %s3 = inlined_call_operand.vmem [shape: f32[32,1], index: 3, kind: input, shape index: {}]
  %s4 = inlined_call_operand.vmem [shape: f32[32,1], index: 4, kind: input, shape index: {}]
  %s5 = inlined_call_operand.vmem [shape: bf16[2,32,512], index: 5, kind: output, shape index: {}]
  %s6 = sld [smem:[#allocation0]]
  $region53: #{conv_forward.1} parent=0
    _
  %s8 = ssub.s32 1, %s6
  %s9 = scalar_select 0, %s8, %s6
  loop: start=0, step=1, limit=4
  $region2: #{conv_forward.1} parent=0 // loop_pre_header
    _
  $region3: #{conv_forward.1} parent=0 // loop_header
    %s11 = sphi 0, %s15
    %p12 = scmp.ge.s32.totalorder %s11, 4
    %s18 = sphi 0, %s30
    %s19 = sphi 0, %s26
    %s20 = sphi 0, %s18
    %s21 = sphi 0, %s19
    %s22 = sphi 0, %s20
    %s23 = sphi 0, %s21
    %s35 = sphi 0, %s37
    %s38 = sphi 0, %s35
    %s39 = sphi 0, %s38
    %s55 = sphi 0, %s39
    %s59 = sphi 0, %s59
    %s61 = sphi 0, %s59
    %s62 = sphi 0, %s61
    %s76 = sphi 0, %s62
    %s80 = sphi 0, %s80
    %s82 = sphi 0, %s80
    %s83 = sphi 0, %s82
    %s97 = sphi 0, %s83
    %s101 = sphi 0, %s101
    %s103 = sphi 0, %s101
    %s104 = sphi 0, %s103
    %s118 = sphi 0, %s104
    %s122 = sphi 0, %s122
    %s124 = sphi 0, %s122
    %s125 = sphi 0, %s124
    %s139 = sphi 0, %s125
    %s147 = sphi 0, %s149
    %s150 = sphi 0, %s147
    %s151 = sphi 0, %s150
    %s167 = sphi 0, %s151
  $region4: #{conv_forward.1} parent=0 // loop_header_branch
    %14 = sbr.rel (%p12) target = $region8
  $region5: #{conv_forward.1} parent=0 // loop_body
    %s16 = ssub.s32 %s11, 1
    %s17 = ssub.s32 %s11, 2
    %s24 = sadd.s32 1, %s19
    %p25 = scmp.ge.s32.totalorder %s24, 1
    %s26 = scalar_select %p25, 0, %s24
    %s27 = sadd.s32 1, %s18
    %s28 = scalar_select %p25, %s27, %s18
    %p29 = scmp.ge.s32.totalorder %s28, 2
    %s30 = scalar_select %p29, 0, %s28
    %s31 = ssub.s32 %s18, %s30
    %s32 = ssub.s32 %s19, %s26
    %s33 = sor.u32 %s31, %s32
    %p34 = scmp.eq.s32.totalorder %s33, 0
    %s36 = sadd.s32 %s35, 1
    %s37 = scalar_select %p34, %s35, %s36
    %p40 = pneg %p34
    %p41 = scmp.eq.s32.totalorder %s11, 1
    %p42 = por %p40, %p41
    %p43 = scmp.ne.s32.totalorder %s35, %s38
    %p44 = scmp.eq.s32.totalorder %s11, 0
    %p45 = por %p43, %p44
    %p46 = scmp.ne.s32.totalorder %s35, %s38
    %p47 = scmp.eq.s32.totalorder %s16, 1
    %p48 = por %p46, %p47
    %p49 = scmp.ne.s32.totalorder %s38, %s39
    %p50 = scmp.eq.s32.totalorder %s16, 0
    %p51 = por %p49, %p50
    %p52 = scmp.ne.s32.totalorder %s38, %s39
    %p53 = scmp.eq.s32.totalorder %s17, 1
    %p54 = por %p52, %p53
    %p56 = scmp.ne.s32.totalorder %s39, %s55
    %p57 = scmp.eq.s32.totalorder %s17, 0
    %p58 = por %p56, %p57
    %s60 = sadd.s32 %s59, 1
    %p63 = scmp.eq.s32.totalorder %s11, 1
    %p64 = scmp.ne.s32.totalorder %s59, %s61
    %p65 = scmp.eq.s32.totalorder %s11, 0
    %p66 = por %p64, %p65
    %p67 = scmp.ne.s32.totalorder %s59, %s61
    %p68 = scmp.eq.s32.totalorder %s16, 1
    %p69 = por %p67, %p68
    %p70 = scmp.ne.s32.totalorder %s61, %s62
    %p71 = scmp.eq.s32.totalorder %s16, 0
    %p72 = por %p70, %p71
    %p73 = scmp.ne.s32.totalorder %s61, %s62
    %p74 = scmp.eq.s32.totalorder %s17, 1
    %p75 = por %p73, %p74
    %p77 = scmp.ne.s32.totalorder %s62, %s76
    %p78 = scmp.eq.s32.totalorder %s17, 0
    %p79 = por %p77, %p78
    %s81 = sadd.s32 %s80, 1
    %p84 = scmp.eq.s32.totalorder %s11, 1
    %p85 = scmp.ne.s32.totalorder %s80, %s82
    %p86 = scmp.eq.s32.totalorder %s11, 0
    %p87 = por %p85, %p86
    %p88 = scmp.ne.s32.totalorder %s80, %s82
    %p89 = scmp.eq.s32.totalorder %s16, 1
    %p90 = por %p88, %p89
    %p91 = scmp.ne.s32.totalorder %s82, %s83
    %p92 = scmp.eq.s32.totalorder %s16, 0
    %p93 = por %p91, %p92
    %p94 = scmp.ne.s32.totalorder %s82, %s83
    %p95 = scmp.eq.s32.totalorder %s17, 1
    %p96 = por %p94, %p95
    %p98 = scmp.ne.s32.totalorder %s83, %s97
    %p99 = scmp.eq.s32.totalorder %s17, 0
    %p100 = por %p98, %p99
    %s102 = sadd.s32 %s101, 1
    %p105 = scmp.eq.s32.totalorder %s11, 1
    %p106 = scmp.ne.s32.totalorder %s101, %s103
    %p107 = scmp.eq.s32.totalorder %s11, 0
    %p108 = por %p106, %p107
    %p109 = scmp.ne.s32.totalorder %s101, %s103
    %p110 = scmp.eq.s32.totalorder %s16, 1
    %p111 = por %p109, %p110
    %p112 = scmp.ne.s32.totalorder %s103, %s104
    %p113 = scmp.eq.s32.totalorder %s16, 0
    %p114 = por %p112, %p113
    %p115 = scmp.ne.s32.totalorder %s103, %s104
    %p116 = scmp.eq.s32.totalorder %s17, 1
    %p117 = por %p115, %p116
    %p119 = scmp.ne.s32.totalorder %s104, %s118
    %p120 = scmp.eq.s32.totalorder %s17, 0
    %p121 = por %p119, %p120
    %s123 = sadd.s32 %s122, 1
    %p126 = scmp.eq.s32.totalorder %s11, 1
    %p127 = scmp.ne.s32.totalorder %s122, %s124
    %p128 = scmp.eq.s32.totalorder %s11, 0
    %p129 = por %p127, %p128
    %p130 = scmp.ne.s32.totalorder %s122, %s124
    %p131 = scmp.eq.s32.totalorder %s16, 1
    %p132 = por %p130, %p131
    %p133 = scmp.ne.s32.totalorder %s124, %s125
    %p134 = scmp.eq.s32.totalorder %s16, 0
    %p135 = por %p133, %p134
    %p136 = scmp.ne.s32.totalorder %s124, %s125
    %p137 = scmp.eq.s32.totalorder %s17, 1
    %p138 = por %p136, %p137
    %p140 = scmp.ne.s32.totalorder %s125, %s139
    %p141 = scmp.eq.s32.totalorder %s17, 0
    %p142 = por %p140, %p141
    %s143 = ssub.s32 %s18, %s30
    %s144 = ssub.s32 %s19, %s26
    %s145 = sor.u32 %s143, %s144
    %p146 = scmp.eq.s32.totalorder %s145, 0
    %s148 = sadd.s32 %s147, 1
    %s149 = scalar_select %p146, %s147, %s148
    %p152 = pneg %p146
    %p153 = scmp.eq.s32.totalorder %s11, 1
    %p154 = por %p152, %p153
    %p155 = scmp.ne.s32.totalorder %s147, %s150
    %p156 = scmp.eq.s32.totalorder %s11, 0
    %p157 = por %p155, %p156
    %p158 = scmp.ne.s32.totalorder %s147, %s150
    %p159 = scmp.eq.s32.totalorder %s16, 1
    %p160 = por %p158, %p159
    %p161 = scmp.ne.s32.totalorder %s150, %s151
    %p162 = scmp.eq.s32.totalorder %s16, 0
    %p163 = por %p161, %p162
    %p164 = scmp.ne.s32.totalorder %s150, %s151
    %p165 = scmp.eq.s32.totalorder %s17, 1
    %p166 = por %p164, %p165
    %p168 = scmp.ne.s32.totalorder %s151, %s167
    %p169 = scmp.eq.s32.totalorder %s17, 0
    %p170 = por %p168, %p169
    %p171 = scmp.le.s32.totalorder 1, %s11
    %p172 = scmp.lt.s32.totalorder %s11, 3
    %p173 = pnand %p171, %p172
    %p174 = pneg %p173
    // Predicated region
    $region9: #{conv_forward.1} parent=5 // pred_check
      _
    $region10: #{conv_forward.1} parent=5 // pred_check_branch
      %176 = sbr.rel (%p173) target = $region12
    $region11: #{conv_forward.1} parent=5 // pred_region
      %s177 = ssub.s32 %s11, 1
      // Predicated region
      $region13: #{conv_forward.1} parent=11 // pred_check
        %p178 = pneg %p72
      $region14: #{conv_forward.1} parent=11 // pred_check_branch
        %180 = sbr.rel (%p178) target = $region16
      $region15: #{conv_forward.1} parent=11 // pred_region
        _
      $region16: #{conv_forward.1} parent=11 // pred_fallthru
        _
      // Predicated region
      $region17: #{conv_forward.1} parent=11 // pred_check
        %p181 = pneg %p93
      $region18: #{conv_forward.1} parent=11 // pred_check_branch
        %183 = sbr.rel (%p181) target = $region20
      $region19: #{conv_forward.1} parent=11 // pred_region
        _
      $region20: #{conv_forward.1} parent=11 // pred_fallthru
        _
      // Predicated region
      $region21: #{conv_forward.1} parent=11 // pred_check
        %p184 = pneg %p114
      $region22: #{conv_forward.1} parent=11 // pred_check_branch
        %186 = sbr.rel (%p184) target = $region24
      $region23: #{conv_forward.1} parent=11 // pred_region
        _
      $region24: #{conv_forward.1} parent=11 // pred_fallthru
        _
      // Predicated region
      $region25: #{conv_forward.1} parent=11 // pred_check
        %p187 = pneg %p135
      $region26: #{conv_forward.1} parent=11 // pred_check_branch
        %189 = sbr.rel (%p187) target = $region28
      $region27: #{conv_forward.1} parent=11 // pred_region
        _
      $region28: #{conv_forward.1} parent=11 // pred_fallthru
        _
    $region12: #{conv_forward.1} parent=5 // pred_fallthru
      _
    %p190 = scmp.lt.s32.totalorder %s11, 2
    // Predicated region
    $region29: #{conv_forward.1} parent=5 // pred_check
      %p191 = pneg %p190
    $region30: #{conv_forward.1} parent=5 // pred_check_branch
      %193 = sbr.rel (%p191) target = $region32
    $region31: #{conv_forward.1} parent=5 // pred_region
      // Predicated region
      $region33: #{conv_forward.1} parent=31 // pred_check
        %p194 = pneg %p45
      $region34: #{conv_forward.1} parent=31 // pred_check_branch
        %196 = sbr.rel (%p194) target = $region36
      $region35: #{conv_forward.1} parent=31 // pred_region
        %s197 = smul.u32 4, %s19
        %p198 = scmp.lt.s32.totalorder %s18, 1
        %s199 = scalar_select %p198, %s18, 1
        %p200 = scmp.lt.s32.totalorder %s197, 3
        %s201 = scalar_select %p200, %s197, 3
        %s202 = smul.addr %s199, 16
        %s203 = sadd.s32 %s201, %s202
        %s204 = smul.addr %s203, 4
        %s205 = scalar_lea.vmem %s0, %s204
        %s206 = smul.u32 4, %s19
      $region36: #{conv_forward.1} parent=31 // pred_fallthru
        _
    $region32: #{conv_forward.1} parent=5 // pred_fallthru
      _
    %p207 = scmp.le.s32.totalorder 1, %s11
    %p208 = scmp.lt.s32.totalorder %s11, 3
    %p209 = pnand %p207, %p208
    %p210 = pneg %p209
    // Predicated region
    $region37: #{conv_forward.1} parent=5 // pred_check
      _
    $region38: #{conv_forward.1} parent=5 // pred_check_branch
      %212 = sbr.rel (%p209) target = $region40
    $region39: #{conv_forward.1} parent=5 // pred_region
      %s213 = ssub.s32 %s11, 1
      %s214 = smul.u32 4, %s21
      %p215 = scmp.lt.s32.totalorder %s20, 1
      %s216 = scalar_select %p215, %s20, 1
      %p217 = scmp.lt.s32.totalorder %s214, 3
      %s218 = scalar_select %p217, %s214, 3
      %s219 = smul.addr %s216, 16
      %s220 = sadd.s32 %s218, %s219
      %s221 = smul.addr %s220, 4
      %s222 = scalar_lea.vmem %s0, %s221
      %p223 = pneg %p51
      %p224 = pneg %p48
      %p225 = pneg %p72
      %p226 = pneg %p69
      %p227 = pneg %p93
      %p228 = pneg %p90
      %p229 = pneg %p114
      %p230 = pneg %p111
      %p231 = pneg %p135
      %p232 = pneg %p132
      %p233 = pneg %p163
      %p234 = pneg %p160
      %s235 = smul.u32 4, %s21
      %p236 = scmp.lt.s32.totalorder %s20, 1
      %s237 = scalar_select %p236, %s20, 1
      %p238 = scmp.lt.s32.totalorder %s235, 3
      %s239 = scalar_select %p238, %s235, 3
      %s240 = smul.addr %s237, 16
      %s241 = sadd.s32 %s239, %s240
      %s242 = smul.addr %s241, 4
      %s243 = scalar_lea.vmem %s5, %s242
      %s244 = smul.u32 4, %s21
      %p245 = scmp.lt.s32.totalorder %s20, 1
      %s246 = scalar_select %p245, %s20, 1
      %p247 = scmp.lt.s32.totalorder %s244, 3
      %s248 = scalar_select %p247, %s244, 3
      %s249 = smul.addr %s246, 16
      %s250 = sadd.s32 %s248, %s249
      %s251 = smul.addr %s250, 4
      %s252 = scalar_lea.vmem %s0, %s251
      %s253 = smul.u32 4, %s21
      %s254 = smul.u32 4, %s21
      %p255 = scmp.lt.s32.totalorder %s20, 1
      %s256 = scalar_select %p255, %s20, 1
      %p257 = scmp.lt.s32.totalorder %s254, 3
      %s258 = scalar_select %p257, %s254, 3
      %s259 = smul.addr %s256, 16
      %s260 = sadd.s32 %s258, %s259
      %s261 = smul.addr %s260, 4
      %s262 = scalar_lea.vmem %s5, %s261
      %s263 = smul.u32 4, %s21
      %v265 = vld [vmem:[%s1] sm:$0xf]
      %v266 = vld [vmem:[%s1 + $0x4] sm:$0xf]
      %v267 = vld [vmem:[%s1 + $0x8] sm:$0xf]
      %v268 = vld [vmem:[%s1 + $0xc] sm:$0xf]
      %v269 = vld [vmem:[%s252] sm:$0xff]
      %v270 = vld [vmem:[%s252 + $0x8] sm:$0xff]
      %v271 = vld [vmem:[%s252 + $0x10] sm:$0xff]
      %v272 = vld [vmem:[%s252 + $0x18] sm:$0xff]
      %v273 = vld [vmem:[%s252 + $0x20] sm:$0xff]
      %v274 = vld [vmem:[%s252 + $0x28] sm:$0xff]
      %v275 = vld [vmem:[%s252 + $0x30] sm:$0xff]
      %v276 = vld [vmem:[%s252 + $0x38] sm:$0xff]
      %v277 = vld [vmem:[%s2] sm:$0xff]
      %v278 = vld [vmem:[%s2 + $0x8] sm:$0xff]
      %v279 = vld [vmem:[%s2 + $0x10] sm:$0xff]
      %v280 = vld [vmem:[%s2 + $0x18] sm:$0xff]
      %282 = vset.pattern.permute.xlu0 0
      %283 = vperm.xlu0 %282, %v277
      %v284 = vpop.permute.xlu0 %283
      %287 = vset.pattern.permute.xlu0 0
      %288 = vperm.xlu0 %287, %v278
      %v289 = vpop.permute.xlu0 %288
      %292 = vset.pattern.permute.xlu0 0
      %293 = vperm.xlu0 %292, %v279
      %v294 = vpop.permute.xlu0 %293
      %297 = vset.pattern.permute.xlu0 0
      %298 = vperm.xlu0 %297, %v280
      %v299 = vpop.permute.xlu0 %298
      %v305 = vunpack.c.l.b16 %v265
      %v306 = vunpack.c.l.b16 %v266
      %v307 = vunpack.c.l.b16 %v267
      %v308 = vunpack.c.l.b16 %v268
      %v309 = vpack.c.b16 %v306, %v305
      %v310 = vpack.c.b16 %v308, %v307
      %v319 = vunpack.c.l.b16 %v269
      %v320 = vunpack.c.h.b16 %v269
      %v321 = vunpack.c.l.b16 %v270
      %v322 = vunpack.c.h.b16 %v270
      %v323 = vunpack.c.l.b16 %v271
      %v324 = vunpack.c.h.b16 %v271
      %v325 = vunpack.c.l.b16 %v272
      %v326 = vunpack.c.h.b16 %v272
      %v327 = vunpack.c.l.b16 %v273
      %v328 = vunpack.c.h.b16 %v273
      %v329 = vunpack.c.l.b16 %v274
      %v330 = vunpack.c.h.b16 %v274
      %v331 = vunpack.c.l.b16 %v275
      %v332 = vunpack.c.h.b16 %v275
      %v333 = vunpack.c.l.b16 %v276
      %v334 = vunpack.c.h.b16 %v276
      %v335 = vpack.c.b16 %v323, %v319
      %v336 = vpack.c.b16 %v324, %v320
      %v337 = vpack.c.b16 %v325, %v321
      %v338 = vpack.c.b16 %v326, %v322
      %v339 = vpack.c.b16 %v331, %v327
      %v340 = vpack.c.b16 %v332, %v328
      %v341 = vpack.c.b16 %v333, %v329
      %v342 = vpack.c.b16 %v334, %v330
      %vm351 = vcmask 261120
      %v353 = vsel %vm351, %v309, 0
      %v356 = vsel %vm351, %v310, 0
      %358 = vmatpush.bf16.msra.mxu0 0
      %359 = vmatpush.bf16.msra.mxu0 0
      %360 = vmatpush.bf16.msra.mxu0 0
      %361 = vmatpush.bf16.msra.mxu0 0
      %362 = vmatpush.bf16.msra.mxu0 0
      %363 = vmatpush.bf16.msra.mxu0 0
      %364 = vmatpush.bf16.msra.mxu0 %v339
      %365 = vmatpush.bf16.msra.mxu0 %v335
      %366 = vmatmul.bf16.gmra.mxu0 %v353
      %v367 = vpop.f32.mrf.mxu0
      %v368 = vadd.f32 %v284, %v367
      %v369 = vpop.f32.mrf.mxu0
      %v370 = vadd.f32 %v289, %v369
      %371 = vmatmul.bf16.gmra.mxu0 %v356
      %v372 = vpop.f32.mrf.mxu0
      %v373 = vadd.f32 %v294, %v372
      %v374 = vpop.f32.mrf.mxu0
      %v375 = vadd.f32 %v299, %v374
      %376 = vdwg.mxu0
      %377 = vmatpush.bf16.msra.mxu0 0
      %378 = vmatpush.bf16.msra.mxu0 0
      %379 = vmatpush.bf16.msra.mxu0 0
      %380 = vmatpush.bf16.msra.mxu0 0
      %381 = vmatpush.bf16.msra.mxu0 0
      %382 = vmatpush.bf16.msra.mxu0 0
      %383 = vmatpush.bf16.msra.mxu0 %v340
      %384 = vmatpush.bf16.msra.mxu0 %v336
      %385 = vmatmul.bf16.gmra.mxu0 %v353
      %v386 = vpop.f32.mrf.mxu0
      %v387 = vadd.f32 %v284, %v386
      %v388 = vpop.f32.mrf.mxu0
      %v389 = vadd.f32 %v289, %v388
      %390 = vmatmul.bf16.gmra.mxu0 %v356
      %v391 = vpop.f32.mrf.mxu0
      %v392 = vadd.f32 %v294, %v391
      %v393 = vpop.f32.mrf.mxu0
      %v394 = vadd.f32 %v299, %v393
      %395 = vdwg.mxu0
      %396 = vmatpush.bf16.msra.mxu0 0
      %397 = vmatpush.bf16.msra.mxu0 0
      %398 = vmatpush.bf16.msra.mxu0 0
      %399 = vmatpush.bf16.msra.mxu0 0
      %400 = vmatpush.bf16.msra.mxu0 0
      %401 = vmatpush.bf16.msra.mxu0 0
      %402 = vmatpush.bf16.msra.mxu0 %v341
      %403 = vmatpush.bf16.msra.mxu0 %v337
      %404 = vmatmul.bf16.gmra.mxu0 %v353
      %v405 = vpop.f32.mrf.mxu0
      %v406 = vadd.f32 %v284, %v405
      %v407 = vpop.f32.mrf.mxu0
      %v408 = vadd.f32 %v289, %v407
      %409 = vmatmul.bf16.gmra.mxu0 %v356
      %v410 = vpop.f32.mrf.mxu0
      %v411 = vadd.f32 %v294, %v410
      %v412 = vpop.f32.mrf.mxu0
      %v413 = vadd.f32 %v299, %v412
      %414 = vdwg.mxu0
      %415 = vmatpush.bf16.msra.mxu0 0
      %416 = vmatpush.bf16.msra.mxu0 0
      %417 = vmatpush.bf16.msra.mxu0 0
      %418 = vmatpush.bf16.msra.mxu0 0
      %419 = vmatpush.bf16.msra.mxu0 0
      %420 = vmatpush.bf16.msra.mxu0 0
      %421 = vmatpush.bf16.msra.mxu0 %v342
      %422 = vmatpush.bf16.msra.mxu0 %v338
      %423 = vmatmul.bf16.gmra.mxu0 %v353
      %v424 = vpop.f32.mrf.mxu0
      %v425 = vadd.f32 %v284, %v424
      %v426 = vpop.f32.mrf.mxu0
      %v427 = vadd.f32 %v289, %v426
      %428 = vmatmul.bf16.gmra.mxu0 %v356
      %v429 = vpop.f32.mrf.mxu0
      %v430 = vadd.f32 %v294, %v429
      %v431 = vpop.f32.mrf.mxu0
      %v432 = vadd.f32 %v299, %v431
      %433 = vdwg.mxu0
      %v434 = vadd.f32 %v368, %v370
      %v435 = vadd.f32 %v434, %v373
      %v436 = vadd.f32 %v435, %v375
      %v437 = vrot.slane %v436, 4
      %v438 = vadd.f32 %v436, %v437
      %v439 = vrot.slane %v438, 2
      %v440 = vadd.f32 %v438, %v439
      %v441 = vrot.slane %v440, 1
      %v442 = vadd.f32 %v440, %v441
      %v443 = vadd.f32 %v387, %v389
      %v444 = vadd.f32 %v443, %v392
      %v445 = vadd.f32 %v444, %v394
      %v446 = vrot.slane %v445, 4
      %v447 = vadd.f32 %v445, %v446
      %v448 = vrot.slane %v447, 2
      %v449 = vadd.f32 %v447, %v448
      %v450 = vrot.slane %v449, 1
      %v451 = vadd.f32 %v449, %v450
      %v452 = vadd.f32 %v406, %v408
      %v453 = vadd.f32 %v452, %v411
      %v454 = vadd.f32 %v453, %v413
      %v455 = vrot.slane %v454, 4
      %v456 = vadd.f32 %v454, %v455
      %v457 = vrot.slane %v456, 2
      %v458 = vadd.f32 %v456, %v457
      %v459 = vrot.slane %v458, 1
      %v460 = vadd.f32 %v458, %v459
      %v461 = vadd.f32 %v425, %v427
      %v462 = vadd.f32 %v461, %v430
      %v463 = vadd.f32 %v462, %v432
      %v464 = vrot.slane %v463, 4
      %v465 = vadd.f32 %v463, %v464
      %v466 = vrot.slane %v465, 2
      %v467 = vadd.f32 %v465, %v466
      %v468 = vrot.slane %v467, 1
      %v469 = vadd.f32 %v467, %v468
      %v470 = vrcp.pop 32.0
      %v471 = vmul.f32 32.0, %v470
      %v472 = vsub.f32 1.0, %v471
      %v473 = vmul.f32 %v470, %v472
      %v474 = vadd.f32 %v470, %v473
      %vm475 = vweird.f32 %v470
      %v476 = vsel %vm475, %v470, %v474
      %v477 = vmul.f32 %v442, %v476
      %v478 = vmul.f32 %v451, %v476
      %v479 = vmul.f32 %v460, %v476
      %v480 = vmul.f32 %v469, %v476
      %v481 = vsub.f32 %v368, %v477
      %v482 = vsub.f32 %v387, %v478
      %v483 = vsub.f32 %v406, %v479
      %v484 = vsub.f32 %v425, %v480
      %v485 = vsub.f32 %v370, %v477
      %v486 = vsub.f32 %v389, %v478
      %v487 = vsub.f32 %v408, %v479
      %v488 = vsub.f32 %v427, %v480
      %v489 = vsub.f32 %v373, %v477
      %v490 = vsub.f32 %v392, %v478
      %v491 = vsub.f32 %v411, %v479
      %v492 = vsub.f32 %v430, %v480
      %v493 = vsub.f32 %v375, %v477
      %v494 = vsub.f32 %v394, %v478
      %v495 = vsub.f32 %v413, %v479
      %v496 = vsub.f32 %v432, %v480
      %v497 = vmul.f32 %v481, %v481
      %v498 = vmul.f32 %v482, %v482
      %v499 = vmul.f32 %v483, %v483
      %v500 = vmul.f32 %v484, %v484
      %v501 = vmul.f32 %v485, %v485
      %v502 = vmul.f32 %v486, %v486
      %v503 = vmul.f32 %v487, %v487
      %v504 = vmul.f32 %v488, %v488
      %v505 = vmul.f32 %v489, %v489
      %v506 = vmul.f32 %v490, %v490
      %v507 = vmul.f32 %v491, %v491
      %v508 = vmul.f32 %v492, %v492
      %v509 = vmul.f32 %v493, %v493
      %v510 = vmul.f32 %v494, %v494
      %v511 = vmul.f32 %v495, %v495
      %v512 = vmul.f32 %v496, %v496
      %v513 = vadd.f32 %v497, %v501
      %v514 = vadd.f32 %v513, %v505
      %v515 = vadd.f32 %v514, %v509
      %v516 = vrot.slane %v515, 4
      %v517 = vadd.f32 %v515, %v516
      %v518 = vrot.slane %v517, 2
      %v519 = vadd.f32 %v517, %v518
      %v520 = vrot.slane %v519, 1
      %v521 = vadd.f32 %v519, %v520
      %v522 = vadd.f32 %v498, %v502
      %v523 = vadd.f32 %v522, %v506
      %v524 = vadd.f32 %v523, %v510
      %v525 = vrot.slane %v524, 4
      %v526 = vadd.f32 %v524, %v525
      %v527 = vrot.slane %v526, 2
      %v528 = vadd.f32 %v526, %v527
      %v529 = vrot.slane %v528, 1
      %v530 = vadd.f32 %v528, %v529
      %v531 = vadd.f32 %v499, %v503
      %v532 = vadd.f32 %v531, %v507
      %v533 = vadd.f32 %v532, %v511
      %v534 = vrot.slane %v533, 4
      %v535 = vadd.f32 %v533, %v534
      %v536 = vrot.slane %v535, 2
      %v537 = vadd.f32 %v535, %v536
      %v538 = vrot.slane %v537, 1
      %v539 = vadd.f32 %v537, %v538
      %v540 = vadd.f32 %v500, %v504
      %v541 = vadd.f32 %v540, %v508
      %v542 = vadd.f32 %v541, %v512
      %v543 = vrot.slane %v542, 4
      %v544 = vadd.f32 %v542, %v543
      %v545 = vrot.slane %v544, 2
      %v546 = vadd.f32 %v544, %v545
      %v547 = vrot.slane %v546, 1
      %v548 = vadd.f32 %v546, %v547
      %v549 = vmul.f32 %v521, %v476
      %v550 = vmul.f32 %v530, %v476
      %v551 = vmul.f32 %v539, %v476
      %v552 = vmul.f32 %v548, %v476
      %v553 = vadd.f32 %v549, 1e-05
      %v554 = vadd.f32 %v550, 1e-05
      %v555 = vadd.f32 %v551, 1e-05
      %v556 = vadd.f32 %v552, 1e-05
      %v557 = vrsqrt.pop %v553
      %v558 = vmul.f32 %v557, %v553
      %v559 = vmul.f32 %v558, %v557
      %v560 = vmul.f32 0.5, %v559
      %v561 = vsub.f32 1.5, %v560
      %v562 = vmul.f32 %v557, %v561
      %vm563 = vweird.f32 %v553
      %vm564 = vweird.f32 %v557
      %vm565 = vmor %vm563, %vm564
      %v566 = vsel %vm565, %v557, %v562
      %v567 = vrsqrt.pop %v554
      %v568 = vmul.f32 %v567, %v554
      %v569 = vmul.f32 %v568, %v567
      %v570 = vmul.f32 0.5, %v569
      %v571 = vsub.f32 1.5, %v570
      %v572 = vmul.f32 %v567, %v571
      %vm573 = vweird.f32 %v554
      %vm574 = vweird.f32 %v567
      %vm575 = vmor %vm573, %vm574
      %v576 = vsel %vm575, %v567, %v572
      %v577 = vrsqrt.pop %v555
      %v578 = vmul.f32 %v577, %v555
      %v579 = vmul.f32 %v578, %v577
      %v580 = vmul.f32 0.5, %v579
      %v581 = vsub.f32 1.5, %v580
      %v582 = vmul.f32 %v577, %v581
      %vm583 = vweird.f32 %v555
      %vm584 = vweird.f32 %v577
      %vm585 = vmor %vm583, %vm584
      %v586 = vsel %vm585, %v577, %v582
      %v587 = vrsqrt.pop %v556
      %v588 = vmul.f32 %v587, %v556
      %v589 = vmul.f32 %v588, %v587
      %v590 = vmul.f32 0.5, %v589
      %v591 = vsub.f32 1.5, %v590
      %v592 = vmul.f32 %v587, %v591
      %vm593 = vweird.f32 %v556
      %vm594 = vweird.f32 %v587
      %vm595 = vmor %vm593, %vm594
      %v596 = vsel %vm595, %v587, %v592
      %v597 = vmul.f32 %v481, %v566
      %v598 = vmul.f32 %v482, %v576
      %v599 = vmul.f32 %v483, %v586
      %v600 = vmul.f32 %v484, %v596
      %v601 = vmul.f32 %v485, %v566
      %v602 = vmul.f32 %v486, %v576
      %v603 = vmul.f32 %v487, %v586
      %v604 = vmul.f32 %v488, %v596
      %v605 = vmul.f32 %v489, %v566
      %v606 = vmul.f32 %v490, %v576
      %v607 = vmul.f32 %v491, %v586
      %v608 = vmul.f32 %v492, %v596
      %v609 = vmul.f32 %v493, %v566
      %v610 = vmul.f32 %v494, %v576
      %v611 = vmul.f32 %v495, %v586
      %v612 = vmul.f32 %v496, %v596
      %v613 = vld [vmem:[%s3] sm:$0xff]
      %v614 = vld [vmem:[%s3 + $0x8] sm:$0xff]
      %v615 = vld [vmem:[%s3 + $0x10] sm:$0xff]
      %v616 = vld [vmem:[%s3 + $0x18] sm:$0xff]
      %618 = vset.pattern.permute.xlu0 0
      %619 = vperm.xlu0 %618, %v613
      %v620 = vpop.permute.xlu0 %619
      %623 = vset.pattern.permute.xlu0 0
      %624 = vperm.xlu0 %623, %v614
      %v625 = vpop.permute.xlu0 %624
      %628 = vset.pattern.permute.xlu0 0
      %629 = vperm.xlu0 %628, %v615
      %v630 = vpop.permute.xlu0 %629
      %633 = vset.pattern.permute.xlu0 0
      %634 = vperm.xlu0 %633, %v616
      %v635 = vpop.permute.xlu0 %634
      %v637 = vmul.f32 %v620, %v597
      %v638 = vmul.f32 %v620, %v598
      %v639 = vmul.f32 %v620, %v599
      %v640 = vmul.f32 %v620, %v600
      %v641 = vmul.f32 %v625, %v601
      %v642 = vmul.f32 %v625, %v602
      %v643 = vmul.f32 %v625, %v603
      %v644 = vmul.f32 %v625, %v604
      %v645 = vmul.f32 %v630, %v605
      %v646 = vmul.f32 %v630, %v606
      %v647 = vmul.f32 %v630, %v607
      %v648 = vmul.f32 %v630, %v608
      %v649 = vmul.f32 %v635, %v609
      %v650 = vmul.f32 %v635, %v610
      %v651 = vmul.f32 %v635, %v611
      %v652 = vmul.f32 %v635, %v612
      %v653 = vld [vmem:[%s4] sm:$0xff]
      %v654 = vld [vmem:[%s4 + $0x8] sm:$0xff]
      %v655 = vld [vmem:[%s4 + $0x10] sm:$0xff]
      %v656 = vld [vmem:[%s4 + $0x18] sm:$0xff]
      %658 = vset.pattern.permute.xlu0 0
      %659 = vperm.xlu0 %658, %v653
      %v660 = vpop.permute.xlu0 %659
      %663 = vset.pattern.permute.xlu0 0
      %664 = vperm.xlu0 %663, %v654
      %v665 = vpop.permute.xlu0 %664
      %668 = vset.pattern.permute.xlu0 0
      %669 = vperm.xlu0 %668, %v655
      %v670 = vpop.permute.xlu0 %669
      %673 = vset.pattern.permute.xlu0 0
      %674 = vperm.xlu0 %673, %v656
      %v675 = vpop.permute.xlu0 %674
      %v677 = vadd.f32 %v637, %v660
      %v678 = vadd.f32 %v638, %v660
      %v679 = vadd.f32 %v639, %v660
      %v680 = vadd.f32 %v640, %v660
      %v681 = vadd.f32 %v641, %v665
      %v682 = vadd.f32 %v642, %v665
      %v683 = vadd.f32 %v643, %v665
      %v684 = vadd.f32 %v644, %v665
      %v685 = vadd.f32 %v645, %v670
      %v686 = vadd.f32 %v646, %v670
      %v687 = vadd.f32 %v647, %v670
      %v688 = vadd.f32 %v648, %v670
      %v689 = vadd.f32 %v649, %v675
      %v690 = vadd.f32 %v650, %v675
      %v691 = vadd.f32 %v651, %v675
      %v692 = vadd.f32 %v652, %v675
      %v693 = vmul.f32 %v677, 0.5
      %v694 = vmul.f32 %v678, 0.5
      %v695 = vmul.f32 %v679, 0.5
      %v696 = vmul.f32 %v680, 0.5
      %v697 = vmul.f32 %v681, 0.5
      %v698 = vmul.f32 %v682, 0.5
      %v699 = vmul.f32 %v683, 0.5
      %v700 = vmul.f32 %v684, 0.5
      %v701 = vmul.f32 %v685, 0.5
      %v702 = vmul.f32 %v686, 0.5
      %v703 = vmul.f32 %v687, 0.5
      %v704 = vmul.f32 %v688, 0.5
      %v705 = vmul.f32 %v689, 0.5
      %v706 = vmul.f32 %v690, 0.5
      %v707 = vmul.f32 %v691, 0.5
      %v708 = vmul.f32 %v692, 0.5
      %v709 = vmul.f32 %v677, 0.70710677
      %v710 = vmul.f32 %v678, 0.70710677
      %v711 = vmul.f32 %v679, 0.70710677
      %v712 = vmul.f32 %v680, 0.70710677
      %v713 = vmul.f32 %v681, 0.70710677
      %v714 = vmul.f32 %v682, 0.70710677
      %v715 = vmul.f32 %v683, 0.70710677
      %v716 = vmul.f32 %v684, 0.70710677
      %v717 = vmul.f32 %v685, 0.70710677
      %v718 = vmul.f32 %v686, 0.70710677
      %v719 = vmul.f32 %v687, 0.70710677
      %v720 = vmul.f32 %v688, 0.70710677
      %v721 = vmul.f32 %v689, 0.70710677
      %v722 = vmul.f32 %v690, 0.70710677
      %v723 = vmul.f32 %v691, 0.70710677
      %v724 = vmul.f32 %v692, 0.70710677
      %v725 = vand.u32 2147483647, %v709
      %v726 = vand.u32 2147483647, %v710
      %v727 = vand.u32 2147483647, %v711
      %v728 = vand.u32 2147483647, %v712
      %v729 = vand.u32 2147483647, %v713
      %v730 = vand.u32 2147483647, %v714
      %v731 = vand.u32 2147483647, %v715
      %v732 = vand.u32 2147483647, %v716
      %v733 = vand.u32 2147483647, %v717
      %v734 = vand.u32 2147483647, %v718
      %v735 = vand.u32 2147483647, %v719
      %v736 = vand.u32 2147483647, %v720
      %v737 = vand.u32 2147483647, %v721
      %v738 = vand.u32 2147483647, %v722
      %v739 = vand.u32 2147483647, %v723
      %v740 = vand.u32 2147483647, %v724
      %v741 = vmul.f32 %v725, 0.3275911
      %v742 = vmul.f32 %v726, 0.3275911
      %v743 = vmul.f32 %v727, 0.3275911
      %v744 = vmul.f32 %v728, 0.3275911
      %v745 = vmul.f32 %v729, 0.3275911
      %v746 = vmul.f32 %v730, 0.3275911
      %v747 = vmul.f32 %v731, 0.3275911
      %v748 = vmul.f32 %v732, 0.3275911
      %v749 = vmul.f32 %v733, 0.3275911
      %v750 = vmul.f32 %v734, 0.3275911
      %v751 = vmul.f32 %v735, 0.3275911
      %v752 = vmul.f32 %v736, 0.3275911
      %v753 = vmul.f32 %v737, 0.3275911
      %v754 = vmul.f32 %v738, 0.3275911
      %v755 = vmul.f32 %v739, 0.3275911
      %v756 = vmul.f32 %v740, 0.3275911
      %v757 = vadd.f32 %v741, 1.0
      %v758 = vadd.f32 %v742, 1.0
      %v759 = vadd.f32 %v743, 1.0
      %v760 = vadd.f32 %v744, 1.0
      %v761 = vadd.f32 %v745, 1.0
      %v762 = vadd.f32 %v746, 1.0
      %v763 = vadd.f32 %v747, 1.0
      %v764 = vadd.f32 %v748, 1.0
      %v765 = vadd.f32 %v749, 1.0
      %v766 = vadd.f32 %v750, 1.0
      %v767 = vadd.f32 %v751, 1.0
      %v768 = vadd.f32 %v752, 1.0
      %v769 = vadd.f32 %v753, 1.0
      %v770 = vadd.f32 %v754, 1.0
      %v771 = vadd.f32 %v755, 1.0
      %v772 = vadd.f32 %v756, 1.0
      %v773 = vrcp.pop %v757
      %v774 = vrcp.pop %v758
      %v775 = vrcp.pop %v759
      %v776 = vrcp.pop %v760
      %v777 = vrcp.pop %v761
      %v778 = vrcp.pop %v762
      %v779 = vrcp.pop %v763
      %v780 = vrcp.pop %v764
      %v781 = vrcp.pop %v765
      %v782 = vrcp.pop %v766
      %v783 = vrcp.pop %v767
      %v784 = vrcp.pop %v768
      %v785 = vrcp.pop %v769
      %v786 = vrcp.pop %v770
      %v787 = vrcp.pop %v771
      %v788 = vrcp.pop %v772
      %v789 = vmul.f32 %v773, 1.0614054
      %v790 = vmul.f32 %v774, 1.0614054
      %v791 = vmul.f32 %v775, 1.0614054
      %v792 = vmul.f32 %v776, 1.0614054
      %v793 = vmul.f32 %v777, 1.0614054
      %v794 = vmul.f32 %v778, 1.0614054
      %v795 = vmul.f32 %v779, 1.0614054
      %v796 = vmul.f32 %v780, 1.0614054
      %v797 = vmul.f32 %v781, 1.0614054
      %v798 = vmul.f32 %v782, 1.0614054
      %v799 = vmul.f32 %v783, 1.0614054
      %v800 = vmul.f32 %v784, 1.0614054
      %v801 = vmul.f32 %v785, 1.0614054
      %v802 = vmul.f32 %v786, 1.0614054
      %v803 = vmul.f32 %v787, 1.0614054
      %v804 = vmul.f32 %v788, 1.0614054
      %v805 = vadd.f32 %v789, -1.4531521
      %v806 = vadd.f32 %v790, -1.4531521
      %v807 = vadd.f32 %v791, -1.4531521
      %v808 = vadd.f32 %v792, -1.4531521
      %v809 = vadd.f32 %v793, -1.4531521
      %v810 = vadd.f32 %v794, -1.4531521
      %v811 = vadd.f32 %v795, -1.4531521
      %v812 = vadd.f32 %v796, -1.4531521
      %v813 = vadd.f32 %v797, -1.4531521
      %v814 = vadd.f32 %v798, -1.4531521
      %v815 = vadd.f32 %v799, -1.4531521
      %v816 = vadd.f32 %v800, -1.4531521
      %v817 = vadd.f32 %v801, -1.4531521
      %v818 = vadd.f32 %v802, -1.4531521
      %v819 = vadd.f32 %v803, -1.4531521
      %v820 = vadd.f32 %v804, -1.4531521
      %v821 = vmul.f32 %v805, %v773
      %v822 = vmul.f32 %v806, %v774
      %v823 = vmul.f32 %v807, %v775
      %v824 = vmul.f32 %v808, %v776
      %v825 = vmul.f32 %v809, %v777
      %v826 = vmul.f32 %v810, %v778
      %v827 = vmul.f32 %v811, %v779
      %v828 = vmul.f32 %v812, %v780
      %v829 = vmul.f32 %v813, %v781
      %v830 = vmul.f32 %v814, %v782
      %v831 = vmul.f32 %v815, %v783
      %v832 = vmul.f32 %v816, %v784
      %v833 = vmul.f32 %v817, %v785
      %v834 = vmul.f32 %v818, %v786
      %v835 = vmul.f32 %v819, %v787
      %v836 = vmul.f32 %v820, %v788
      %v837 = vadd.f32 %v821, 1.4214138
      %v838 = vadd.f32 %v822, 1.4214138
      %v839 = vadd.f32 %v823, 1.4214138
      %v840 = vadd.f32 %v824, 1.4214138
      %v841 = vadd.f32 %v825, 1.4214138
      %v842 = vadd.f32 %v826, 1.4214138
      %v843 = vadd.f32 %v827, 1.4214138
      %v844 = vadd.f32 %v828, 1.4214138
      %v845 = vadd.f32 %v829, 1.4214138
      %v846 = vadd.f32 %v830, 1.4214138
      %v847 = vadd.f32 %v831, 1.4214138
      %v848 = vadd.f32 %v832, 1.4214138
      %v849 = vadd.f32 %v833, 1.4214138
      %v850 = vadd.f32 %v834, 1.4214138
      %v851 = vadd.f32 %v835, 1.4214138
      %v852 = vadd.f32 %v836, 1.4214138
      %v853 = vmul.f32 %v837, %v773
      %v854 = vmul.f32 %v838, %v774
      %v855 = vmul.f32 %v839, %v775
      %v856 = vmul.f32 %v840, %v776
      %v857 = vmul.f32 %v841, %v777
      %v858 = vmul.f32 %v842, %v778
      %v859 = vmul.f32 %v843, %v779
      %v860 = vmul.f32 %v844, %v780
      %v861 = vmul.f32 %v845, %v781
      %v862 = vmul.f32 %v846, %v782
      %v863 = vmul.f32 %v847, %v783
      %v864 = vmul.f32 %v848, %v784
      %v865 = vmul.f32 %v849, %v785
      %v866 = vmul.f32 %v850, %v786
      %v867 = vmul.f32 %v851, %v787
      %v868 = vmul.f32 %v852, %v788
      %v869 = vadd.f32 %v853, -0.28449672
      %v870 = vadd.f32 %v854, -0.28449672
      %v871 = vadd.f32 %v855, -0.28449672
      %v872 = vadd.f32 %v856, -0.28449672
      %v873 = vadd.f32 %v857, -0.28449672
      %v874 = vadd.f32 %v858, -0.28449672
      %v875 = vadd.f32 %v859, -0.28449672
      %v876 = vadd.f32 %v860, -0.28449672
      %v877 = vadd.f32 %v861, -0.28449672
      %v878 = vadd.f32 %v862, -0.28449672
      %v879 = vadd.f32 %v863, -0.28449672
      %v880 = vadd.f32 %v864, -0.28449672
      %v881 = vadd.f32 %v865, -0.28449672
      %v882 = vadd.f32 %v866, -0.28449672
      %v883 = vadd.f32 %v867, -0.28449672
      %v884 = vadd.f32 %v868, -0.28449672
      %v885 = vmul.f32 %v869, %v773
      %v886 = vmul.f32 %v870, %v774
      %v887 = vmul.f32 %v871, %v775
      %v888 = vmul.f32 %v872, %v776
      %v889 = vmul.f32 %v873, %v777
      %v890 = vmul.f32 %v874, %v778
      %v891 = vmul.f32 %v875, %v779
      %v892 = vmul.f32 %v876, %v780
      %v893 = vmul.f32 %v877, %v781
      %v894 = vmul.f32 %v878, %v782
      %v895 = vmul.f32 %v879, %v783
      %v896 = vmul.f32 %v880, %v784
      %v897 = vmul.f32 %v881, %v785
      %v898 = vmul.f32 %v882, %v786
      %v899 = vmul.f32 %v883, %v787
      %v900 = vmul.f32 %v884, %v788
      %v901 = vadd.f32 %v885, 0.2548296
      %v902 = vadd.f32 %v886, 0.2548296
      %v903 = vadd.f32 %v887, 0.2548296
      %v904 = vadd.f32 %v888, 0.2548296
      %v905 = vadd.f32 %v889, 0.2548296
      %v906 = vadd.f32 %v890, 0.2548296
      %v907 = vadd.f32 %v891, 0.2548296
      %v908 = vadd.f32 %v892, 0.2548296
      %v909 = vadd.f32 %v893, 0.2548296
      %v910 = vadd.f32 %v894, 0.2548296
      %v911 = vadd.f32 %v895, 0.2548296
      %v912 = vadd.f32 %v896, 0.2548296
      %v913 = vadd.f32 %v897, 0.2548296
      %v914 = vadd.f32 %v898, 0.2548296
      %v915 = vadd.f32 %v899, 0.2548296
      %v916 = vadd.f32 %v900, 0.2548296
      %v917 = vmul.f32 %v901, %v773
      %v918 = vmul.f32 %v902, %v774
      %v919 = vmul.f32 %v903, %v775
      %v920 = vmul.f32 %v904, %v776
      %v921 = vmul.f32 %v905, %v777
      %v922 = vmul.f32 %v906, %v778
      %v923 = vmul.f32 %v907, %v779
      %v924 = vmul.f32 %v908, %v780
      %v925 = vmul.f32 %v909, %v781
      %v926 = vmul.f32 %v910, %v782
      %v927 = vmul.f32 %v911, %v783
      %v928 = vmul.f32 %v912, %v784
      %v929 = vmul.f32 %v913, %v785
      %v930 = vmul.f32 %v914, %v786
      %v931 = vmul.f32 %v915, %v787
      %v932 = vmul.f32 %v916, %v788
      %v933 = vsub.f32 0.0, %v725
      %v934 = vsub.f32 0.0, %v726
      %v935 = vsub.f32 0.0, %v727
      %v936 = vsub.f32 0.0, %v728
      %v937 = vsub.f32 0.0, %v729
      %v938 = vsub.f32 0.0, %v730
      %v939 = vsub.f32 0.0, %v731
      %v940 = vsub.f32 0.0, %v732
      %v941 = vsub.f32 0.0, %v733
      %v942 = vsub.f32 0.0, %v734
      %v943 = vsub.f32 0.0, %v735
      %v944 = vsub.f32 0.0, %v736
      %v945 = vsub.f32 0.0, %v737
      %v946 = vsub.f32 0.0, %v738
      %v947 = vsub.f32 0.0, %v739
      %v948 = vsub.f32 0.0, %v740
      %v949 = vmul.f32 %v933, %v725
      %v950 = vmul.f32 %v934, %v726
      %v951 = vmul.f32 %v935, %v727
      %v952 = vmul.f32 %v936, %v728
      %v953 = vmul.f32 %v937, %v729
      %v954 = vmul.f32 %v938, %v730
      %v955 = vmul.f32 %v939, %v731
      %v956 = vmul.f32 %v940, %v732
      %v957 = vmul.f32 %v941, %v733
      %v958 = vmul.f32 %v942, %v734
      %v959 = vmul.f32 %v943, %v735
      %v960 = vmul.f32 %v944, %v736
      %v961 = vmul.f32 %v945, %v737
      %v962 = vmul.f32 %v946, %v738
      %v963 = vmul.f32 %v947, %v739
      %v964 = vmul.f32 %v948, %v740
      %v965 = vmul.f32 %v949, 1.442695
      %v966 = vpow.pop %v965
      %v967 = vmul.f32 %v950, 1.442695
      %v968 = vpow.pop %v967
      %v969 = vmul.f32 %v951, 1.442695
      %v970 = vpow.pop %v969
      %v971 = vmul.f32 %v952, 1.442695
      %v972 = vpow.pop %v971
      %v973 = vmul.f32 %v953, 1.442695
      %v974 = vpow.pop %v973
      %v975 = vmul.f32 %v954, 1.442695
      %v976 = vpow.pop %v975
      %v977 = vmul.f32 %v955, 1.442695
      %v978 = vpow.pop %v977
      %v979 = vmul.f32 %v956, 1.442695
      %v980 = vpow.pop %v979
      %v981 = vmul.f32 %v957, 1.442695
      %v982 = vpow.pop %v981
      %v983 = vmul.f32 %v958, 1.442695
      %v984 = vpow.pop %v983
      %v985 = vmul.f32 %v959, 1.442695
      %v986 = vpow.pop %v985
      %v987 = vmul.f32 %v960, 1.442695
      %v988 = vpow.pop %v987
      %v989 = vmul.f32 %v961, 1.442695
      %v990 = vpow.pop %v989
      %v991 = vmul.f32 %v962, 1.442695
      %v992 = vpow.pop %v991
      %v993 = vmul.f32 %v963, 1.442695
      %v994 = vpow.pop %v993
      %v995 = vmul.f32 %v964, 1.442695
      %v996 = vpow.pop %v995
      %v997 = vmul.f32 %v917, %v966
      %v998 = vmul.f32 %v918, %v968
      %v999 = vmul.f32 %v919, %v970
      %v1000 = vmul.f32 %v920, %v972
      %v1001 = vmul.f32 %v921, %v974
      %v1002 = vmul.f32 %v922, %v976
      %v1003 = vmul.f32 %v923, %v978
      %v1004 = vmul.f32 %v924, %v980
      %v1005 = vmul.f32 %v925, %v982
      %v1006 = vmul.f32 %v926, %v984
      %v1007 = vmul.f32 %v927, %v986
      %v1008 = vmul.f32 %v928, %v988
      %v1009 = vmul.f32 %v929, %v990
      %v1010 = vmul.f32 %v930, %v992
      %v1011 = vmul.f32 %v931, %v994
      %v1012 = vmul.f32 %v932, %v996
      %v1013 = vsub.f32 1.0, %v997
      %v1014 = vsub.f32 1.0, %v998
      %v1015 = vsub.f32 1.0, %v999
      %v1016 = vsub.f32 1.0, %v1000
      %v1017 = vsub.f32 1.0, %v1001
      %v1018 = vsub.f32 1.0, %v1002
      %v1019 = vsub.f32 1.0, %v1003
      %v1020 = vsub.f32 1.0, %v1004
      %v1021 = vsub.f32 1.0, %v1005
      %v1022 = vsub.f32 1.0, %v1006
      %v1023 = vsub.f32 1.0, %v1007
      %v1024 = vsub.f32 1.0, %v1008
      %v1025 = vsub.f32 1.0, %v1009
      %v1026 = vsub.f32 1.0, %v1010
      %v1027 = vsub.f32 1.0, %v1011
      %v1028 = vsub.f32 1.0, %v1012
      %vm1029 = vcmp.ge.f32.partialorder %v709, 0.0
      %vm1030 = vcmp.ge.f32.partialorder %v710, 0.0
      %vm1031 = vcmp.ge.f32.partialorder %v711, 0.0
      %vm1032 = vcmp.ge.f32.partialorder %v712, 0.0
      %vm1033 = vcmp.ge.f32.partialorder %v713, 0.0
      %vm1034 = vcmp.ge.f32.partialorder %v714, 0.0
      %vm1035 = vcmp.ge.f32.partialorder %v715, 0.0
      %vm1036 = vcmp.ge.f32.partialorder %v716, 0.0
      %vm1037 = vcmp.ge.f32.partialorder %v717, 0.0
      %vm1038 = vcmp.ge.f32.partialorder %v718, 0.0
      %vm1039 = vcmp.ge.f32.partialorder %v719, 0.0
      %vm1040 = vcmp.ge.f32.partialorder %v720, 0.0
      %vm1041 = vcmp.ge.f32.partialorder %v721, 0.0
      %vm1042 = vcmp.ge.f32.partialorder %v722, 0.0
      %vm1043 = vcmp.ge.f32.partialorder %v723, 0.0
      %vm1044 = vcmp.ge.f32.partialorder %v724, 0.0
      %v1045 = vsub.f32 0.0, %v1013
      %v1046 = vsub.f32 0.0, %v1014
      %v1047 = vsub.f32 0.0, %v1015
      %v1048 = vsub.f32 0.0, %v1016
      %v1049 = vsub.f32 0.0, %v1017
      %v1050 = vsub.f32 0.0, %v1018
      %v1051 = vsub.f32 0.0, %v1019
      %v1052 = vsub.f32 0.0, %v1020
      %v1053 = vsub.f32 0.0, %v1021
      %v1054 = vsub.f32 0.0, %v1022
      %v1055 = vsub.f32 0.0, %v1023
      %v1056 = vsub.f32 0.0, %v1024
      %v1057 = vsub.f32 0.0, %v1025
      %v1058 = vsub.f32 0.0, %v1026
      %v1059 = vsub.f32 0.0, %v1027
      %v1060 = vsub.f32 0.0, %v1028
      %v1061 = vsel %vm1029, %v1013, %v1045
      %v1062 = vsel %vm1030, %v1014, %v1046
      %v1063 = vsel %vm1031, %v1015, %v1047
      %v1064 = vsel %vm1032, %v1016, %v1048
      %v1065 = vsel %vm1033, %v1017, %v1049
      %v1066 = vsel %vm1034, %v1018, %v1050
      %v1067 = vsel %vm1035, %v1019, %v1051
      %v1068 = vsel %vm1036, %v1020, %v1052
      %v1069 = vsel %vm1037, %v1021, %v1053
      %v1070 = vsel %vm1038, %v1022, %v1054
      %v1071 = vsel %vm1039, %v1023, %v1055
      %v1072 = vsel %vm1040, %v1024, %v1056
      %v1073 = vsel %vm1041, %v1025, %v1057
      %v1074 = vsel %vm1042, %v1026, %v1058
      %v1075 = vsel %vm1043, %v1027, %v1059
      %v1076 = vsel %vm1044, %v1028, %v1060
      %v1077 = vadd.f32 %v1061, 1.0
      %v1078 = vadd.f32 %v1062, 1.0
      %v1079 = vadd.f32 %v1063, 1.0
      %v1080 = vadd.f32 %v1064, 1.0
      %v1081 = vadd.f32 %v1065, 1.0
      %v1082 = vadd.f32 %v1066, 1.0
      %v1083 = vadd.f32 %v1067, 1.0
      %v1084 = vadd.f32 %v1068, 1.0
      %v1085 = vadd.f32 %v1069, 1.0
      %v1086 = vadd.f32 %v1070, 1.0
      %v1087 = vadd.f32 %v1071, 1.0
      %v1088 = vadd.f32 %v1072, 1.0
      %v1089 = vadd.f32 %v1073, 1.0
      %v1090 = vadd.f32 %v1074, 1.0
      %v1091 = vadd.f32 %v1075, 1.0
      %v1092 = vadd.f32 %v1076, 1.0
      %v1093 = vmul.f32 %v693, %v1077
      %v1094 = vmul.f32 %v694, %v1078
      %v1095 = vmul.f32 %v695, %v1079
      %v1096 = vmul.f32 %v696, %v1080
      %v1097 = vmul.f32 %v697, %v1081
      %v1098 = vmul.f32 %v698, %v1082
      %v1099 = vmul.f32 %v699, %v1083
      %v1100 = vmul.f32 %v700, %v1084
      %v1101 = vmul.f32 %v701, %v1085
      %v1102 = vmul.f32 %v702, %v1086
      %v1103 = vmul.f32 %v703, %v1087
      %v1104 = vmul.f32 %v704, %v1088
      %v1105 = vmul.f32 %v705, %v1089
      %v1106 = vmul.f32 %v706, %v1090
      %v1107 = vmul.f32 %v707, %v1091
      %v1108 = vmul.f32 %v708, %v1092
      %v1109 = vpack.c.bf16 %v1094, %v1093
      %v1110 = vpack.c.bf16 %v1096, %v1095
      %v1111 = vpack.c.bf16 %v1098, %v1097
      %v1112 = vpack.c.bf16 %v1100, %v1099
      %v1113 = vpack.c.bf16 %v1102, %v1101
      %v1114 = vpack.c.bf16 %v1104, %v1103
      %v1115 = vpack.c.bf16 %v1106, %v1105
      %v1116 = vpack.c.bf16 %v1108, %v1107
      %1117 = vst [vmem:[%s262] sm:$0xff] %v1109
      %1118 = vst [vmem:[%s262 + $0x8] sm:$0xff] %v1110
      %1119 = vst [vmem:[%s262 + $0x10] sm:$0xff] %v1111
      %1120 = vst [vmem:[%s262 + $0x18] sm:$0xff] %v1112
      %1121 = vst [vmem:[%s262 + $0x20] sm:$0xff] %v1113
      %1122 = vst [vmem:[%s262 + $0x28] sm:$0xff] %v1114
      %1123 = vst [vmem:[%s262 + $0x30] sm:$0xff] %v1115
      %1124 = vst [vmem:[%s262 + $0x38] sm:$0xff] %v1116
      %s1125 = smul.u32 4, %s21
      %p1126 = scmp.lt.s32.totalorder %s20, 1
      %s1127 = scalar_select %p1126, %s20, 1
      %p1128 = scmp.lt.s32.totalorder %s1125, 3
      %s1129 = scalar_select %p1128, %s1125, 3
      %s1130 = smul.addr %s1127, 16
      %s1131 = sadd.s32 %s1129, %s1130
      %s1132 = smul.addr %s1131, 4
      %s1133 = scalar_lea.vmem %s5, %s1132
      // Predicated region
      $region41: #{conv_forward.1} parent=39 // pred_check
        %p1134 = pneg %p160
      $region42: #{conv_forward.1} parent=39 // pred_check_branch
        %1136 = sbr.rel (%p1134) target = $region44
      $region43: #{conv_forward.1} parent=39 // pred_region
        %s1137 = smul.u32 4, %s21
      $region44: #{conv_forward.1} parent=39 // pred_fallthru
        _
    $region40: #{conv_forward.1} parent=5 // pred_fallthru
      _
    %p1138 = scmp.le.s32.totalorder 2, %s11
    // Predicated region
    $region45: #{conv_forward.1} parent=5 // pred_check
      %p1139 = pneg %p1138
    $region46: #{conv_forward.1} parent=5 // pred_check_branch
      %1141 = sbr.rel (%p1139) target = $region48
    $region47: #{conv_forward.1} parent=5 // pred_region
      %s1142 = ssub.s32 %s11, 2
      // Predicated region
      $region49: #{conv_forward.1} parent=47 // pred_check
        %p1143 = pneg %p166
      $region50: #{conv_forward.1} parent=47 // pred_check_branch
        %1145 = sbr.rel (%p1143) target = $region52
      $region51: #{conv_forward.1} parent=47 // pred_region
        %s1146 = smul.u32 4, %s23
        %p1147 = scmp.lt.s32.totalorder %s22, 1
        %s1148 = scalar_select %p1147, %s22, 1
        %p1149 = scmp.lt.s32.totalorder %s1146, 3
        %s1150 = scalar_select %p1149, %s1146, 3
        %s1151 = smul.addr %s1148, 16
        %s1152 = sadd.s32 %s1150, %s1151
        %s1153 = smul.addr %s1152, 4
        %s1154 = scalar_lea.vmem %s5, %s1153
      $region52: #{conv_forward.1} parent=47 // pred_fallthru
        _
    $region48: #{conv_forward.1} parent=5 // pred_fallthru
      _
  $region6: #{conv_forward.1} parent=0 // loop_footer
    %s15 = sadd.s32 1, %s11
  $region7: #{conv_forward.1} parent=0 // loop_footer_branch
    %10 = sbr.rel target = $region3
  $region8: #{conv_forward.1} parent=0 // loop_exit
    _

</llo_original>
